<compile_context>
chip_gen: v7x
topology: tpu7x:2x2x1
jax: 0.10.0
libtpu: 0.0.40
codegen_flags: <defaults>
</compile_context>

<pallas_src>
import functools

import jax
import jax.numpy as jnp
import numpy as np
from jax.experimental import pallas as pl
from jax.experimental.pallas import tpu as pltpu


def generate_encoder(in_channels, max_len):
    """Same sin/cos table as the PyTorch generate_encoder()."""
    pos = jnp.arange(max_len, dtype=jnp.float32)[:, None]          # (L, 1)
    i = jnp.arange(in_channels, dtype=jnp.float32)[None, :]        # (1, C/2)
    angle_rates = 1.0 / jnp.power(10000.0,
                                  2.0 * jnp.floor(i / 2.0) / in_channels)
    pe = pos * angle_rates
    pe = pe.at[:, 0::2].set(jnp.sin(pe[:, 0::2]))
    pe = pe.at[:, 1::2].set(jnp.cos(pe[:, 1::2]))
    return pe                                                      # (L, C/2)


def ape2d_fused_kernel(x_ref, pos_ref, wi_t_ref, bi_ref, wa_t_ref, ba_ref,
                       out_ref, *, true_hw):
    # Block: (TB, C, HWp). Padded spatial columns (if any) are zeros.
    x = x_ref[...].astype(jnp.float32)
    tb, c, hwp = x.shape

    # --- global average pool over the true (unpadded) spatial extent ---------
    e = jnp.sum(x, axis=2) * (1.0 / float(true_hw))        # (TB, C)

    # --- a = sigmoid(alpha(relu(inter(e)))) ----------------------------------
    if c >= 128:
        # Production-size channels: use the MXU.
        hid = jnp.dot(e, wi_t_ref[...],
                      preferred_element_type=jnp.float32) + bi_ref[...]
        hid = jnp.maximum(hid, 0.0)
        a = jnp.dot(hid, wa_t_ref[...],
                    preferred_element_type=jnp.float32) + ba_ref[...]
    else:
        # Tiny channels: do the contraction on the VPU instead of a padded MXU tile.
        hid = jnp.sum(e[:, :, None] * wi_t_ref[...][None, :, :],
                      axis=1) + bi_ref[...]
        hid = jnp.maximum(hid, 0.0)
        a = jnp.sum(hid[:, :, None] * wa_t_ref[...][None, :, :],
                    axis=1) + ba_ref[...]
    a = jax.nn.sigmoid(a)                                  # (TB, C)

    # --- fused broadcast-FMA add: out[b,c,s] = x[b,c,s] + a[b,c]*pos[c,s] -----
    out_ref[...] = (x + a[:, :, None] * pos_ref[...][None, :, :]
                    ).astype(out_ref.dtype)


def ape2d_fma_kernel(x_ref, a_ref, pos_ref, out_ref):
    # Fallback for feature maps too large to hold one full image per block:
    # gate `a` is precomputed (tiny XLA MLP); this kernel is a pure gated FMA
    # streamed over lane-dense (batch, HW) tiles.
    b_idx = pl.program_id(0)
    gate = a_ref[pl.ds(b_idx, 1), :]                       # (1, C) f32
    x = x_ref[...].astype(jnp.float32)                     # (1, C, T_HW)
    out_ref[...] = (x + gate[:, :, None] * pos_ref[...][None, :, :]
                    ).astype(out_ref.dtype)


def _vmem_limit_bytes():
    try:
        cap = int(pltpu.get_tpu_info().vmem_capacity_bytes)
    except Exception:
        cap = 64 * 1024 * 1024                             # conservative (v7x)
    # ~75% of physical, capped at 96 MiB (v5e/v6e), floor 32 MiB.
    return max(32 * 1024 * 1024, min((cap * 3) // 4, 96 * 1024 * 1024))


def adaptive_pos_encoding_2d(x_nchw, params, donate_input=False):
    b, c, h, w = x_nchw.shape
    half = c // 2
    hw = h * w
    hw_pad = ((hw + 127) // 128) * 128                     # lane-dense spatial axis
    dtype = x_nchw.dtype
    itemsize = jnp.dtype(dtype).itemsize

    # ---- batch-invariant table work, hoisted out of the kernel (plain XLA) --
    h_lin = params['h_pe'][:h] @ params['wh'].T + params['bh']     # (h, half)
    w_lin = params['w_pe'][:w] @ params['ww'].T + params['bw']     # (w, half)
    pos_h = jnp.broadcast_to(h_lin.T[:, :, None], (half, h, w))    # h-half
    pos_w = jnp.broadcast_to(w_lin.T[:, None, :], (half, h, w))    # w-half
    pos = jnp.concatenate([pos_h, pos_w], axis=0).reshape(c, hw)   # (c, hw)

    # Free contiguous reshape NCHW -> NC(HW); pad spatial axis to 128 lanes.
    x_flat = x_nchw.reshape(b, c, hw)
    if hw_pad != hw:
        x_flat = jnp.pad(x_flat, ((0, 0), (0, 0), (0, hw_pad - hw)))
        pos = jnp.pad(pos, ((0, 0), (0, hw_pad - hw)))

    # nn.Linear stores (out, in); pre-transpose once (glue only).
    wi_t = params['wi'].T
    wa_t = params['wa'].T

    # ---- generation-aware block budget ---------------------------------------
    vmem_limit = _vmem_limit_bytes()
    # Real VMEM cost ~ 2x double-buffered input + 2x output copies of the x
    # block, plus invariants and f32 temps -> budget the x block at limit/8
    # (~12 MiB on v5e/v6e, ~6 MiB on v7x).
    budget = max(1 << 20, vmem_limit // 8)
    per_img = c * hw_pad * itemsize

    if per_img <= budget:
        # ---- fused path: pool + gate MLP + FMA in one kernel -----------------
        tb = max(1, min(b, budget // per_img))
        # Megacore (v7x): guarantee >= 2 grid steps when blocks stay >= 1 MiB.
        if b > 1 and pl.cdiv(b, tb) < 2 and pl.cdiv(b, 2) * per_img >= (1 << 20):
            tb = pl.cdiv(b, 2)
        grid0 = pl.cdiv(b, tb)

        kern = functools.partial(ape2d_fused_kernel, true_hw=hw)
        aliases = {0: 0} if (donate_input and hw_pad == hw) else {}

        def build(single_buffer_invariants):
            inv = ({'pipeline_mode': pl.Buffered(1)}
                   if single_buffer_invariants else {})
            return pl.pallas_call(
                kern,
                out_shape=jax.ShapeDtypeStruct((b, c, hw_pad), dtype),
                grid=(grid0,),
                in_specs=[
                    pl.BlockSpec((tb, c, hw_pad), lambda i: (i, 0, 0)),  # x (streamed)
                    pl.BlockSpec((c, hw_pad), lambda i: (0, 0), **inv),  # pos table
                    pl.BlockSpec((c, c), lambda i: (0, 0), **inv),       # inter W^T
                    pl.BlockSpec((1, c), lambda i: (0, 0), **inv),       # inter b
                    pl.BlockSpec((c, c), lambda i: (0, 0), **inv),       # alpha W^T
                    pl.BlockSpec((1, c), lambda i: (0, 0), **inv),       # alpha b
                ],
                out_specs=pl.BlockSpec((tb, c, hw_pad), lambda i: (i, 0, 0)),
                input_output_aliases=aliases,
                compiler_params=pltpu.CompilerParams(
                    dimension_semantics=("parallel",),
                    vmem_limit_bytes=vmem_limit),
            )

        args = (x_flat, pos, wi_t, params['bi'], wa_t, params['ba'])
        try:
            out_flat = jax.block_until_ready(build(True)(*args))
        except Exception:
            # Installed JAX rejects single-buffering -> default double-buffered.
            out_flat = build(False)(*args)
    else:
        # ---- large-feature-map fallback (e.g. big C*HW on v7x's 64 MiB VMEM) -
        # The gate MLP is tiny -> plain XLA; Pallas handles the HBM-bound FMA
        # over lane-dense (batch, HW) tiles that always fit VMEM.
        e = jnp.mean(x_nchw.astype(jnp.float32), axis=(2, 3))          # (b, c)
        hid = jnp.maximum(e @ wi_t + params['bi'][0], 0.0)
        a = jax.nn.sigmoid(hid @ wa_t + params['ba'][0]).astype(jnp.float32)

        t_hw = max(128, (budget // (c * itemsize)) // 128 * 128)
        t_hw = min(t_hw, hw_pad)
        n_hw = pl.cdiv(hw_pad, t_hw)

        out_flat = pl.pallas_call(
            ape2d_fma_kernel,
            out_shape=jax.ShapeDtypeStruct((b, c, hw_pad), dtype),
            grid=(b, n_hw),
            in_specs=[
                pl.BlockSpec((1, c, t_hw), lambda i, j: (i, 0, j)),   # x tile
                pl.BlockSpec((b, c), lambda i, j: (0, 0)),            # gate a
                pl.BlockSpec((c, t_hw), lambda i, j: (0, j)),         # pos tile
            ],
            out_specs=pl.BlockSpec((1, c, t_hw), lambda i, j: (i, 0, j)),
            compiler_params=pltpu.CompilerParams(
                dimension_semantics=("parallel", "parallel"),
                vmem_limit_bytes=vmem_limit),
        )(x_flat, a, pos)

    if hw_pad != hw:
        out_flat = out_flat[:, :, :hw]
    # Free contiguous reshape back to NCHW.
    return out_flat.reshape(b, c, h, w)


def reference(x, params):
    """Pure-JAX replica of the PyTorch forward (eval mode)."""
    b, c, h, w = x.shape
    half = c // 2
    e = jnp.mean(x, axis=(2, 3))                                      # (b, c)
    hid = jnp.maximum(e @ params['wi'].T + params['bi'][0], 0.0)
    a = jax.nn.sigmoid(hid @ params['wa'].T + params['ba'][0])        # (b, c)

    h_pe = params['h_pe'][:h] @ params['wh'].T + params['bh'][0]      # (h, half)
    w_pe = params['w_pe'][:w] @ params['ww'].T + params['bw'][0]      # (w, half)
    pos_h = a[:, :half, None, None] * h_pe.T[None, :, :, None]        # (b,half,h,1)
    pos_w = a[:, half:, None, None] * w_pe.T[None, :, None, :]        # (b,half,1,w)
    pos = jnp.concatenate(
        [jnp.broadcast_to(pos_h, (b, half, h, w)),
         jnp.broadcast_to(pos_w, (b, half, h, w))], axis=1)           # (b,c,h,w)
    return x + pos


if __name__ == "__main__":
    b, c, h, w = 2, 8, 16, 16
    half = c // 2
    max_h, max_w = 64, 128

    key = jax.random.PRNGKey(0)
    keys = jax.random.split(key, 9)
    params = {
        'h_pe': generate_encoder(half, max_h),
        'w_pe': generate_encoder(half, max_w),
        'wh': 0.1 * jax.random.normal(keys[0], (half, half), jnp.float32),
        'bh': 0.1 * jax.random.normal(keys[1], (1, half), jnp.float32),
        'ww': 0.1 * jax.random.normal(keys[2], (half, half), jnp.float32),
        'bw': 0.1 * jax.random.normal(keys[3], (1, half), jnp.float32),
        'wi': 0.1 * jax.random.normal(keys[4], (c, c), jnp.float32),
        'bi': 0.1 * jax.random.normal(keys[5], (1, c), jnp.float32),
        'wa': 0.1 * jax.random.normal(keys[6], (c, c), jnp.float32),
        'ba': 0.1 * jax.random.normal(keys[7], (1, c), jnp.float32),
    }
    x = jax.random.normal(keys[8], (b, c, h, w), jnp.float32)

    out = adaptive_pos_encoding_2d(x, params)
    out = jax.block_until_ready(out)

    ref = reference(x, params)
    np.testing.assert_allclose(np.asarray(out), np.asarray(ref),
                               rtol=1e-5, atol=1e-5)
    print("KERNEL_OK")
</pallas_src>

<mosaic_0001>
module attributes {stable_mosaic.version = 11 : i64} {
  func.func @ape2d_fused_kernel(%arg0: i32, %arg1: memref<2x8x256xf32, #tpu.memory_space<vmem>>, %arg2: memref<8x256xf32, #tpu.memory_space<vmem>>, %arg3: memref<8x8xf32, #tpu.memory_space<vmem>>, %arg4: memref<1x8xf32, #tpu.memory_space<vmem>>, %arg5: memref<8x8xf32, #tpu.memory_space<vmem>>, %arg6: memref<1x8xf32, #tpu.memory_space<vmem>>, %arg7: memref<2x8x256xf32, #tpu.memory_space<vmem>>) attributes {dimension_semantics = [#tpu.dimension_semantics<parallel>], iteration_bounds = array<i64: 1>, scalar_prefetch = 0 : i64, scratch_operands = 0 : i64, tpu.core_type = #tpu.core_type<tc>, window_params = [{transform_indices = @transform_0, window_bounds = array<i64: 2, 8, 256>}, {pipeline_mode = #tpu.pipeline_mode<synchronous>, transform_indices = @transform_1, window_bounds = array<i64: 8, 256>}, {pipeline_mode = #tpu.pipeline_mode<synchronous>, transform_indices = @transform_2, window_bounds = array<i64: 8, 8>}, {pipeline_mode = #tpu.pipeline_mode<synchronous>, transform_indices = @transform_3, window_bounds = array<i64: 1, 8>}, {pipeline_mode = #tpu.pipeline_mode<synchronous>, transform_indices = @transform_4, window_bounds = array<i64: 8, 8>}, {pipeline_mode = #tpu.pipeline_mode<synchronous>, transform_indices = @transform_5, window_bounds = array<i64: 1, 8>}, {transform_indices = @transform_6, window_bounds = array<i64: 2, 8, 256>}]} {
    %c0 = arith.constant 0 : index
    %c0_0 = arith.constant 0 : index
    %c0_1 = arith.constant 0 : index
    %0 = vector.load %arg1[%c0, %c0_0, %c0_1] : memref<2x8x256xf32, #tpu.memory_space<vmem>>, vector<2x8x256xf32>
    %cst = arith.constant dense<0.000000e+00> : vector<2x8xf32>
    %1 = vector.multi_reduction <add>, %0, %cst [2] : vector<2x8x256xf32> to vector<2x8xf32>
    %cst_2 = arith.constant 3.906250e-03 : f32
    %2 = vector.broadcast %cst_2 : f32 to vector<2x8xf32>
    %3 = arith.mulf %1, %2 : vector<2x8xf32>
    %4 = vector.shape_cast %3 : vector<2x8xf32> to vector<2x8x1xf32>
    %c0_3 = arith.constant 0 : index
    %c0_4 = arith.constant 0 : index
    %5 = vector.load %arg3[%c0_3, %c0_4] : memref<8x8xf32, #tpu.memory_space<vmem>>, vector<8x8xf32>
    %6 = vector.shape_cast %5 : vector<8x8xf32> to vector<1x8x8xf32>
    %7 = vector.broadcast %4 : vector<2x8x1xf32> to vector<2x8x8xf32>
    %8 = vector.broadcast %6 : vector<1x8x8xf32> to vector<2x8x8xf32>
    %9 = arith.mulf %7, %8 : vector<2x8x8xf32>
    %cst_5 = arith.constant dense<0.000000e+00> : vector<2x8xf32>
    %10 = vector.multi_reduction <add>, %9, %cst_5 [1] : vector<2x8x8xf32> to vector<2x8xf32>
    %c0_6 = arith.constant 0 : index
    %c0_7 = arith.constant 0 : index
    %11 = vector.load %arg4[%c0_6, %c0_7] : memref<1x8xf32, #tpu.memory_space<vmem>>, vector<1x8xf32>
    %12 = vector.broadcast %11 : vector<1x8xf32> to vector<2x8xf32>
    %13 = arith.addf %10, %12 : vector<2x8xf32>
    %cst_8 = arith.constant 0.000000e+00 : f32
    %14 = vector.broadcast %cst_8 : f32 to vector<2x8xf32>
    %15 = arith.maximumf %13, %14 : vector<2x8xf32>
    %16 = vector.shape_cast %15 : vector<2x8xf32> to vector<2x8x1xf32>
    %c0_9 = arith.constant 0 : index
    %c0_10 = arith.constant 0 : index
    %17 = vector.load %arg5[%c0_9, %c0_10] : memref<8x8xf32, #tpu.memory_space<vmem>>, vector<8x8xf32>
    %18 = vector.shape_cast %17 : vector<8x8xf32> to vector<1x8x8xf32>
    %19 = vector.broadcast %16 : vector<2x8x1xf32> to vector<2x8x8xf32>
    %20 = vector.broadcast %18 : vector<1x8x8xf32> to vector<2x8x8xf32>
    %21 = arith.mulf %19, %20 : vector<2x8x8xf32>
    %cst_11 = arith.constant dense<0.000000e+00> : vector<2x8xf32>
    %22 = vector.multi_reduction <add>, %21, %cst_11 [1] : vector<2x8x8xf32> to vector<2x8xf32>
    %c0_12 = arith.constant 0 : index
    %c0_13 = arith.constant 0 : index
    %23 = vector.load %arg6[%c0_12, %c0_13] : memref<1x8xf32, #tpu.memory_space<vmem>>, vector<1x8xf32>
    %24 = vector.broadcast %23 : vector<1x8xf32> to vector<2x8xf32>
    %25 = arith.addf %22, %24 : vector<2x8xf32>
    %26 = arith.negf %25 : vector<2x8xf32>
    %27 = math.exp %26 : vector<2x8xf32>
    %cst_14 = arith.constant 1.000000e+00 : f32
    %28 = vector.broadcast %cst_14 : f32 to vector<2x8xf32>
    %29 = arith.addf %28, %27 : vector<2x8xf32>
    %30 = arith.divf %28, %29 : vector<2x8xf32>
    %31 = vector.shape_cast %30 : vector<2x8xf32> to vector<2x8x1xf32>
    %c0_15 = arith.constant 0 : index
    %c0_16 = arith.constant 0 : index
    %32 = vector.load %arg2[%c0_15, %c0_16] : memref<8x256xf32, #tpu.memory_space<vmem>>, vector<8x256xf32>
    %33 = vector.shape_cast %32 : vector<8x256xf32> to vector<1x8x256xf32>
    %34 = vector.broadcast %31 : vector<2x8x1xf32> to vector<2x8x256xf32>
    %35 = vector.broadcast %33 : vector<1x8x256xf32> to vector<2x8x256xf32>
    %36 = arith.mulf %34, %35 : vector<2x8x256xf32>
    %37 = arith.addf %0, %36 : vector<2x8x256xf32>
    %c0_17 = arith.constant 0 : index
    %c0_18 = arith.constant 0 : index
    %c0_19 = arith.constant 0 : index
    %38 = vector.load %arg7[%c0_17, %c0_18, %c0_19] : memref<2x8x256xf32, #tpu.memory_space<vmem>>, vector<2x8x256xf32>
    tpu.vector_store %arg7[%c0_17, %c0_18, %c0_19], %37 {strides = array<i32>} : memref<2x8x256xf32, #tpu.memory_space<vmem>>, vector<2x8x256xf32>,
    return
  }
  func.func @transform_0(%arg0: i32) -> (i32, i32, i32) {
    %c0_i32 = arith.constant 0 : i32
    %c0_i32_0 = arith.constant 0 : i32
    %c0_i32_1 = arith.constant 0 : i32
    return %arg0, %c0_i32, %c0_i32_0 : i32, i32, i32
  }
  func.func @transform_1(%arg0: i32) -> (i32, i32) {
    %c0_i32 = arith.constant 0 : i32
    %c0_i32_0 = arith.constant 0 : i32
    %c0_i32_1 = arith.constant 0 : i32
    return %c0_i32, %c0_i32_0 : i32, i32
  }
  func.func @transform_2(%arg0: i32) -> (i32, i32) {
    %c0_i32 = arith.constant 0 : i32
    %c0_i32_0 = arith.constant 0 : i32
    %c0_i32_1 = arith.constant 0 : i32
    return %c0_i32, %c0_i32_0 : i32, i32
  }
  func.func @transform_3(%arg0: i32) -> (i32, i32) {
    %c0_i32 = arith.constant 0 : i32
    %c0_i32_0 = arith.constant 0 : i32
    %c0_i32_1 = arith.constant 0 : i32
    return %c0_i32, %c0_i32_0 : i32, i32
  }
  func.func @transform_4(%arg0: i32) -> (i32, i32) {
    %c0_i32 = arith.constant 0 : i32
    %c0_i32_0 = arith.constant 0 : i32
    %c0_i32_1 = arith.constant 0 : i32
    return %c0_i32, %c0_i32_0 : i32, i32
  }
  func.func @transform_5(%arg0: i32) -> (i32, i32) {
    %c0_i32 = arith.constant 0 : i32
    %c0_i32_0 = arith.constant 0 : i32
    %c0_i32_1 = arith.constant 0 : i32
    return %c0_i32, %c0_i32_0 : i32, i32
  }
  func.func @transform_6(%arg0: i32) -> (i32, i32, i32) {
    %c0_i32 = arith.constant 0 : i32
    %c0_i32_0 = arith.constant 0 : i32
    %c0_i32_1 = arith.constant 0 : i32
    return %arg0, %c0_i32, %c0_i32_0 : i32, i32, i32
  }
}

module attributes {stable_mosaic.version = 11 : i64} {
  func.func @ape2d_fused_kernel(%arg0: i32, %arg1: memref<2x8x256xf32, #tpu.memory_space<vmem>>, %arg2: memref<8x256xf32, #tpu.memory_space<vmem>>, %arg3: memref<8x8xf32, #tpu.memory_space<vmem>>, %arg4: memref<1x8xf32, #tpu.memory_space<vmem>>, %arg5: memref<8x8xf32, #tpu.memory_space<vmem>>, %arg6: memref<1x8xf32, #tpu.memory_space<vmem>>, %arg7: memref<2x8x256xf32, #tpu.memory_space<vmem>>) attributes {dimension_semantics = [#tpu.dimension_semantics<parallel>], iteration_bounds = array<i64: 1>, scalar_prefetch = 0 : i64, scratch_operands = 0 : i64, tpu.core_type = #tpu.core_type<tc>, window_params = [{transform_indices = @transform_0, window_bounds = array<i64: 2, 8, 256>}, {pipeline_mode = #tpu.pipeline_mode<synchronous>, transform_indices = @transform_1, window_bounds = array<i64: 8, 256>}, {pipeline_mode = #tpu.pipeline_mode<synchronous>, transform_indices = @transform_2, window_bounds = array<i64: 8, 8>}, {pipeline_mode = #tpu.pipeline_mode<synchronous>, transform_indices = @transform_3, window_bounds = array<i64: 1, 8>}, {pipeline_mode = #tpu.pipeline_mode<synchronous>, transform_indices = @transform_4, window_bounds = array<i64: 8, 8>}, {pipeline_mode = #tpu.pipeline_mode<synchronous>, transform_indices = @transform_5, window_bounds = array<i64: 1, 8>}, {transform_indices = @transform_6, window_bounds = array<i64: 2, 8, 256>}]} {
    %c0 = arith.constant 0 : index
    %c0_0 = arith.constant 0 : index
    %c0_1 = arith.constant 0 : index
    %0 = vector.load %arg1[%c0, %c0_0, %c0_1] : memref<2x8x256xf32, #tpu.memory_space<vmem>>, vector<2x8x256xf32>
    %cst = arith.constant dense<0.000000e+00> : vector<2x8xf32>
    %1 = vector.multi_reduction <add>, %0, %cst [2] : vector<2x8x256xf32> to vector<2x8xf32>
    %cst_2 = arith.constant 3.906250e-03 : f32
    %2 = vector.broadcast %cst_2 : f32 to vector<2x8xf32>
    %3 = arith.mulf %1, %2 : vector<2x8xf32>
    %4 = vector.shape_cast %3 : vector<2x8xf32> to vector<2x8x1xf32>
    %c0_3 = arith.constant 0 : index
    %c0_4 = arith.constant 0 : index
    %5 = vector.load %arg3[%c0_3, %c0_4] : memref<8x8xf32, #tpu.memory_space<vmem>>, vector<8x8xf32>
    %6 = vector.shape_cast %5 : vector<8x8xf32> to vector<1x8x8xf32>
    %7 = vector.broadcast %4 : vector<2x8x1xf32> to vector<2x8x8xf32>
    %8 = vector.broadcast %6 : vector<1x8x8xf32> to vector<2x8x8xf32>
    %9 = arith.mulf %7, %8 : vector<2x8x8xf32>
    %cst_5 = arith.constant dense<0.000000e+00> : vector<2x8xf32>
    %10 = vector.multi_reduction <add>, %9, %cst_5 [1] : vector<2x8x8xf32> to vector<2x8xf32>
    %c0_6 = arith.constant 0 : index
    %c0_7 = arith.constant 0 : index
    %11 = vector.load %arg4[%c0_6, %c0_7] : memref<1x8xf32, #tpu.memory_space<vmem>>, vector<1x8xf32>
    %12 = vector.broadcast %11 : vector<1x8xf32> to vector<2x8xf32>
    %13 = arith.addf %10, %12 : vector<2x8xf32>
    %cst_8 = arith.constant 0.000000e+00 : f32
    %14 = vector.broadcast %cst_8 : f32 to vector<2x8xf32>
    %15 = arith.maximumf %13, %14 : vector<2x8xf32>
    %16 = vector.shape_cast %15 : vector<2x8xf32> to vector<2x8x1xf32>
    %c0_9 = arith.constant 0 : index
    %c0_10 = arith.constant 0 : index
    %17 = vector.load %arg5[%c0_9, %c0_10] : memref<8x8xf32, #tpu.memory_space<vmem>>, vector<8x8xf32>
    %18 = vector.shape_cast %17 : vector<8x8xf32> to vector<1x8x8xf32>
    %19 = vector.broadcast %16 : vector<2x8x1xf32> to vector<2x8x8xf32>
    %20 = vector.broadcast %18 : vector<1x8x8xf32> to vector<2x8x8xf32>
    %21 = arith.mulf %19, %20 : vector<2x8x8xf32>
    %cst_11 = arith.constant dense<0.000000e+00> : vector<2x8xf32>
    %22 = vector.multi_reduction <add>, %21, %cst_11 [1] : vector<2x8x8xf32> to vector<2x8xf32>
    %c0_12 = arith.constant 0 : index
    %c0_13 = arith.constant 0 : index
    %23 = vector.load %arg6[%c0_12, %c0_13] : memref<1x8xf32, #tpu.memory_space<vmem>>, vector<1x8xf32>
    %24 = vector.broadcast %23 : vector<1x8xf32> to vector<2x8xf32>
    %25 = arith.addf %22, %24 : vector<2x8xf32>
    %26 = arith.negf %25 : vector<2x8xf32>
    %27 = math.exp %26 : vector<2x8xf32>
    %cst_14 = arith.constant 1.000000e+00 : f32
    %28 = vector.broadcast %cst_14 : f32 to vector<2x8xf32>
    %29 = arith.addf %28, %27 : vector<2x8xf32>
    %30 = arith.divf %28, %29 : vector<2x8xf32>
    %31 = vector.shape_cast %30 : vector<2x8xf32> to vector<2x8x1xf32>
    %c0_15 = arith.constant 0 : index
    %c0_16 = arith.constant 0 : index
    %32 = vector.load %arg2[%c0_15, %c0_16] : memref<8x256xf32, #tpu.memory_space<vmem>>, vector<8x256xf32>
    %33 = vector.shape_cast %32 : vector<8x256xf32> to vector<1x8x256xf32>
    %34 = vector.broadcast %31 : vector<2x8x1xf32> to vector<2x8x256xf32>
    %35 = vector.broadcast %33 : vector<1x8x256xf32> to vector<2x8x256xf32>
    %36 = arith.mulf %34, %35 : vector<2x8x256xf32>
    %37 = arith.addf %0, %36 : vector<2x8x256xf32>
    %c0_17 = arith.constant 0 : index
    %c0_18 = arith.constant 0 : index
    %c0_19 = arith.constant 0 : index
    %38 = vector.load %arg7[%c0_17, %c0_18, %c0_19] : memref<2x8x256xf32, #tpu.memory_space<vmem>>, vector<2x8x256xf32>
    tpu.vector_store %arg7[%c0_17, %c0_18, %c0_19], %37 {strides = array<i32>} : memref<2x8x256xf32, #tpu.memory_space<vmem>>, vector<2x8x256xf32>,
    return
  }
  func.func @transform_0(%arg0: i32) -> (i32, i32, i32) {
    %c0_i32 = arith.constant 0 : i32
    %c0_i32_0 = arith.constant 0 : i32
    %c0_i32_1 = arith.constant 0 : i32
    return %arg0, %c0_i32, %c0_i32_0 : i32, i32, i32
  }
  func.func @transform_1(%arg0: i32) -> (i32, i32) {
    %c0_i32 = arith.constant 0 : i32
    %c0_i32_0 = arith.constant 0 : i32
    %c0_i32_1 = arith.constant 0 : i32
    return %c0_i32, %c0_i32_0 : i32, i32
  }
  func.func @transform_2(%arg0: i32) -> (i32, i32) {
    %c0_i32 = arith.constant 0 : i32
    %c0_i32_0 = arith.constant 0 : i32
    %c0_i32_1 = arith.constant 0 : i32
    return %c0_i32, %c0_i32_0 : i32, i32
  }
  func.func @transform_3(%arg0: i32) -> (i32, i32) {
    %c0_i32 = arith.constant 0 : i32
    %c0_i32_0 = arith.constant 0 : i32
    %c0_i32_1 = arith.constant 0 : i32
    return %c0_i32, %c0_i32_0 : i32, i32
  }
  func.func @transform_4(%arg0: i32) -> (i32, i32) {
    %c0_i32 = arith.constant 0 : i32
    %c0_i32_0 = arith.constant 0 : i32
    %c0_i32_1 = arith.constant 0 : i32
    return %c0_i32, %c0_i32_0 : i32, i32
  }
  func.func @transform_5(%arg0: i32) -> (i32, i32) {
    %c0_i32 = arith.constant 0 : i32
    %c0_i32_0 = arith.constant 0 : i32
    %c0_i32_1 = arith.constant 0 : i32
    return %c0_i32, %c0_i32_0 : i32, i32
  }
  func.func @transform_6(%arg0: i32) -> (i32, i32, i32) {
    %c0_i32 = arith.constant 0 : i32
    %c0_i32_0 = arith.constant 0 : i32
    %c0_i32_1 = arith.constant 0 : i32
    return %arg0, %c0_i32, %c0_i32_0 : i32, i32, i32
  }
}

</mosaic_0001>

<llo_original>
// kernel: tpu_custom_call.1
$region0: #{tpu_custom_call.1}
  #allocation0 [shape = 'u32[]', space=smem, size = 0x4, offset = 0x4, fixed_abs, tag = 'smem constant byte address 0x4 - core index']
  #allocation1 [shape = 'u32[144,128]{1,0:T(1,128)}', space=vmem, size = 0x12000, scoped, tag = 'internal scratch']
  %s0 = inlined_call_operand.hbm [shape: f32[2,8,256], index: 0, kind: input, shape index: {}]
  %s1 = inlined_call_operand.hbm [shape: f32[8,256], index: 1, kind: input, shape index: {}]
  %s2 = inlined_call_operand.hbm [shape: f32[8,8], index: 2, kind: input, shape index: {}]
  %s3 = inlined_call_operand.vmem [shape: f32[1,8], index: 3, kind: input, shape index: {}]
  %s4 = inlined_call_operand.vmem [shape: f32[8,8], index: 4, kind: input, shape index: {}]
  %s5 = inlined_call_operand.vmem [shape: f32[1,8], index: 5, kind: input, shape index: {}]
  %s6 = inlined_call_operand.hbm [shape: f32[2,8,256], index: 6, kind: output, shape index: {}]
  %s7 = sld [smem:[#allocation0]]
  $region46: #{tpu_custom_call.1} parent=0
    _
  %s9 = ssub.s32 1, %s7
  %s10 = scalar_select 0, %s9, %s7
  $region1: #{tpu_custom_call.1} parent=0
    #allocation2 [shape = 'u8[16384]{0}', space=vmem, size = 0x4000, scoped, tag = 'input window, operand 0, single buffered']
    #allocation3 [shape = 's32[1]{0}', space=sflag, size = 0x4, scoped, tag = 'scoped memory for tpu_custom_call.1']
    #allocation4 [shape = 's32[1]{0}', space=sflag, size = 0x4, scoped, tag = 'scoped memory for tpu_custom_call.1']
    #allocation5 [shape = 'u8[8192]{0}', space=vmem, size = 0x2000, scoped, tag = 'input window, operand 1, single buffered']
    #allocation6 [shape = 's32[1]{0}', space=sflag, size = 0x4, scoped, tag = 'scoped memory for tpu_custom_call.1']
    #allocation7 [shape = 'u8[4096]{0}', space=vmem, size = 0x1000, scoped, tag = 'input window, operand 2, single buffered']
    #allocation8 [shape = 'u8[16384]{0}', space=vmem, size = 0x4000, scoped, tag = 'output window, operand 0, single buffered']
    %11 = vsyncpa [#allocation3], 0
    %12 = vsyncpa [#allocation6], 0
    %13 = vsyncpa [#allocation4], 0
    // Predicated region
    $region2: #{tpu_custom_call.1} parent=1 // pred_check
      _
    $region3: #{tpu_custom_call.1} parent=1 // pred_check_branch
      %15 = sbr.rel (0) target = $region5
    $region4: #{tpu_custom_call.1} parent=1 // pred_region
      %s17 = ssub.s32 512, 512
      %18 = vsyncadd [#allocation3], %s17
      %s19 = sshll.u32 [#allocation2], 4
      %s20 = int_to_ptr.vmem [resolvable:$true] %s19
      %25 = dma.hbm_to_vmem [thread:$0]  %s0, 512, %s20, [#allocation3], 256, 256, 16
    $region5: #{tpu_custom_call.1} parent=1 // pred_fallthru
      _
    // Predicated region
    $region6: #{tpu_custom_call.1} parent=1 // pred_check
      _
    $region7: #{tpu_custom_call.1} parent=1 // pred_check_branch
      %27 = sbr.rel (0) target = $region9
    $region8: #{tpu_custom_call.1} parent=1 // pred_region
      %s29 = ssub.s32 256, 256
      %30 = vsyncadd [#allocation6], %s29
      %s32 = sshll.u32 [#allocation5], 4
      %s33 = int_to_ptr.vmem [resolvable:$true] %s32
      %35 = dma.hbm_to_vmem [thread:$0]  %s1, 256, %s33, [#allocation6]
    $region9: #{tpu_custom_call.1} parent=1 // pred_fallthru
      _
    // Predicated region
    $region10: #{tpu_custom_call.1} parent=1 // pred_check
      _
    $region11: #{tpu_custom_call.1} parent=1 // pred_check_branch
      %37 = sbr.rel (0) target = $region13
    $region12: #{tpu_custom_call.1} parent=1 // pred_region
      %s39 = ssub.s32 128, 128
      %40 = vsyncadd [#allocation6], %s39
      %s42 = sshll.u32 [#allocation7], 4
      %s43 = int_to_ptr.vmem [resolvable:$true] %s42
      %45 = dma.hbm_to_vmem [thread:$0]  %s2, 128, %s43, [#allocation6]
    $region13: #{tpu_custom_call.1} parent=1 // pred_fallthru
      _
    // Predicated region
    $region14: #{tpu_custom_call.1} parent=1 // pred_check
      _
    $region15: #{tpu_custom_call.1} parent=1 // pred_check_branch
      %47 = sbr.rel (0) target = $region17
    $region16: #{tpu_custom_call.1} parent=1 // pred_region
      _
    $region17: #{tpu_custom_call.1} parent=1 // pred_fallthru
      _
    // Predicated region
    $region18: #{tpu_custom_call.1} parent=1 // pred_check
      _
    $region19: #{tpu_custom_call.1} parent=1 // pred_check_branch
      %49 = sbr.rel (0) target = $region21
    $region20: #{tpu_custom_call.1} parent=1 // pred_region
      _
    $region21: #{tpu_custom_call.1} parent=1 // pred_fallthru
      _
    // Predicated region
    $region22: #{tpu_custom_call.1} parent=1 // pred_check
      _
    $region23: #{tpu_custom_call.1} parent=1 // pred_check_branch
      %51 = sbr.rel (0) target = $region25
    $region24: #{tpu_custom_call.1} parent=1 // pred_region
      _
    $region25: #{tpu_custom_call.1} parent=1 // pred_fallthru
      _
    // Predicated region
    $region26: #{tpu_custom_call.1} parent=1 // pred_check
      _
    $region27: #{tpu_custom_call.1} parent=1 // pred_check_branch
      %53 = sbr.rel (0) target = $region29
    $region28: #{tpu_custom_call.1} parent=1 // pred_region
      %54 = dma.done [#allocation3], 512
    $region29: #{tpu_custom_call.1} parent=1 // pred_fallthru
      _
    // Predicated region
    $region30: #{tpu_custom_call.1} parent=1 // pred_check
      _
    $region31: #{tpu_custom_call.1} parent=1 // pred_check_branch
      %56 = sbr.rel (0) target = $region33
    $region32: #{tpu_custom_call.1} parent=1 // pred_region
      %57 = dma.done [#allocation6], 256
    $region33: #{tpu_custom_call.1} parent=1 // pred_fallthru
      _
    // Predicated region
    $region34: #{tpu_custom_call.1} parent=1 // pred_check
      _
    $region35: #{tpu_custom_call.1} parent=1 // pred_check_branch
      %59 = sbr.rel (0) target = $region37
    $region36: #{tpu_custom_call.1} parent=1 // pred_region
      %60 = dma.done [#allocation6], 128
    $region37: #{tpu_custom_call.1} parent=1 // pred_fallthru
      _
    %v61 = vld [vmem:[#allocation2] sm:$0xff]
    %v62 = vld [vmem:[#allocation2 + $0x8] sm:$0xff]
    %v63 = vld [vmem:[#allocation2 + $0x10] sm:$0xff]
    %v64 = vld [vmem:[#allocation2 + $0x18] sm:$0xff]
    %v65 = vadd.f32 %v61, %v62
    %66 = vadd.xlane.f32.xlu0 %v65
    %v67 = vpop.xlane.xlu0 %66
    %v68 = vadd.f32 %v63, %v64
    %69 = vadd.xlane.f32.xlu0 %v68
    %v70 = vpop.xlane.xlu0 %69
    %v71 = vmul.f32 %v67, 0.00390625
    %v72 = vmul.f32 %v70, 0.00390625
    %v73 = vld [vmem:[#allocation7] sm:$0xff]
    %v74 = vmul.f32 %v71, %v73
    %v75 = vmul.f32 %v72, %v73
    %vm76 = vcmask 64512
    %v77 = vsel %vm76, %v74, 0.0
    %v78 = vrot.slane %v77, 4
    %v79 = vadd.f32 %v77, %v78
    %v80 = vrot.slane %v79, 2
    %v81 = vadd.f32 %v79, %v80
    %v82 = vrot.slane %v81, 1
    %v83 = vadd.f32 %v81, %v82
    %v84 = vsel %vm76, %v75, 0.0
    %v85 = vrot.slane %v84, 4
    %v86 = vadd.f32 %v84, %v85
    %v87 = vrot.slane %v86, 2
    %v88 = vadd.f32 %v86, %v87
    %v89 = vrot.slane %v88, 1
    %v90 = vadd.f32 %v88, %v89
    %v91 = vld [vmem:[%s3] sm:$0x1]
    %v93 = vlaneseq
    %v94 = vshrl.u32 %v93, 7
    %v95 = vsub.s32 0, %v94
    %v96 = vrot.slane %v91, %v95
    %v98 = vadd.f32 %v83, %v96
    %v99 = vadd.f32 %v90, %v96
    %v100 = vmax.f32 %v98, 0.0
    %v101 = vmax.f32 %v99, 0.0
    %v102 = vlaneseq
    %v103 = vshrl.u32 %v102, 7
    %v104 = vsub.s32 0, %v103
    %v105 = vrot.slane %v100, %v104
    %107 = vbcast.lane.b32.xlu0 %v105, 256
    %v108 = vpop.permute.xlu0 %107
    %v109 = vlaneseq
    %v110 = vshrl.u32 %v109, 7
    %v111 = vsub.s32 0, %v110
    %v112 = vrot.slane %v101, %v111
    %114 = vbcast.lane.b32.xlu0 %v112, 256
    %v115 = vpop.permute.xlu0 %114
    %v116 = vld [vmem:[%s4] sm:$0xff]
    %v117 = vmul.f32 %v108, %v116
    %v118 = vmul.f32 %v115, %v116
    %v119 = vsel %vm76, %v117, 0.0
    %v120 = vrot.slane %v119, 4
    %v121 = vadd.f32 %v119, %v120
    %v122 = vrot.slane %v121, 2
    %v123 = vadd.f32 %v121, %v122
    %v124 = vrot.slane %v123, 1
    %v125 = vadd.f32 %v123, %v124
    %v126 = vsel %vm76, %v118, 0.0
    %v127 = vrot.slane %v126, 4
    %v128 = vadd.f32 %v126, %v127
    %v129 = vrot.slane %v128, 2
    %v130 = vadd.f32 %v128, %v129
    %v131 = vrot.slane %v130, 1
    %v132 = vadd.f32 %v130, %v131
    %v133 = vld [vmem:[%s5] sm:$0x1]
    %v135 = vlaneseq
    %v136 = vshrl.u32 %v135, 7
    %v137 = vsub.s32 0, %v136
    %v138 = vrot.slane %v133, %v137
    %v140 = vadd.f32 %v125, %v138
    %v141 = vadd.f32 %v132, %v138
    %v142 = vxor.u32 %v140, 2147483648
    %v143 = vxor.u32 %v141, 2147483648
    %v144 = vmul.f32 %v142, 1.442695
    %v145 = vpow.pop %v144
    %v146 = vmul.f32 %v143, 1.442695
    %v147 = vpow.pop %v146
    %v148 = vadd.f32 %v145, 1.0
    %v149 = vadd.f32 %v147, 1.0
    %v150 = vrcp.pop %v148
    %v151 = vmul.f32 1.0, %v150
    %v152 = vrcp.pop %v149
    %v153 = vmul.f32 1.0, %v152
    %v154 = vlaneseq
    %v155 = vshrl.u32 %v154, 7
    %v156 = vsub.s32 0, %v155
    %v157 = vrot.slane %v151, %v156
    %159 = vbcast.lane.b32.xlu0 %v157, 256
    %v160 = vpop.permute.xlu0 %159
    %v161 = vlaneseq
    %v162 = vshrl.u32 %v161, 7
    %v163 = vsub.s32 0, %v162
    %v164 = vrot.slane %v153, %v163
    %166 = vbcast.lane.b32.xlu0 %v164, 256
    %v167 = vpop.permute.xlu0 %166
    %v168 = vld [vmem:[#allocation5] sm:$0xff]
    %v169 = vld [vmem:[#allocation5 + $0x8] sm:$0xff]
    %v170 = vmul.f32 %v160, %v168
    %v171 = vmul.f32 %v160, %v169
    %v172 = vmul.f32 %v167, %v168
    %v173 = vmul.f32 %v167, %v169
    %v174 = vadd.f32 %v61, %v170
    %v175 = vadd.f32 %v62, %v171
    %v176 = vadd.f32 %v63, %v172
    %v177 = vadd.f32 %v64, %v173
    %178 = vst [vmem:[#allocation8] sm:$0xff] %v174
    %179 = vst [vmem:[#allocation8 + $0x8] sm:$0xff] %v175
    %180 = vst [vmem:[#allocation8 + $0x10] sm:$0xff] %v176
    %181 = vst [vmem:[#allocation8 + $0x18] sm:$0xff] %v177
    // Predicated region
    $region38: #{tpu_custom_call.1} parent=1 // pred_check
      _
    $region39: #{tpu_custom_call.1} parent=1 // pred_check_branch
      %183 = sbr.rel (0) target = $region41
    $region40: #{tpu_custom_call.1} parent=1 // pred_region
      %s185 = ssub.s32 512, 512
      %186 = vsyncadd [#allocation4], %s185
      %s187 = sshll.u32 [#allocation8], 4
      %s188 = int_to_ptr.vmem [resolvable:$true] %s187
      %193 = dma.vmem_to_hbm [thread:$0]  %s188, 512, %s6, [#allocation4], 256, 256, 16
    $region41: #{tpu_custom_call.1} parent=1 // pred_fallthru
      _
    // Predicated region
    $region42: #{tpu_custom_call.1} parent=1 // pred_check
      _
    $region43: #{tpu_custom_call.1} parent=1 // pred_check_branch
      %195 = sbr.rel (0) target = $region45
    $region44: #{tpu_custom_call.1} parent=1 // pred_region
      %196 = dma.done [#allocation4], 512
    $region45: #{tpu_custom_call.1} parent=1 // pred_fallthru
      _
    %197 = vsyncpa [#allocation3], 1
    %198 = vsyncpa [#allocation6], 1
    %199 = vsyncpa [#allocation4], 1

// kernel: tpu_custom_call.1
$region0: #{tpu_custom_call.1}
  #allocation0 [shape = 'u32[]', space=smem, size = 0x4, offset = 0x4, fixed_abs, tag = 'smem constant byte address 0x4 - core index']
  #allocation1 [shape = 'u32[144,128]{1,0:T(1,128)}', space=vmem, size = 0x12000, scoped, tag = 'internal scratch']
  %s0 = inlined_call_operand.hbm [shape: f32[2,8,256], index: 0, kind: input, shape index: {}]
  %s1 = inlined_call_operand.hbm [shape: f32[8,256], index: 1, kind: input, shape index: {}]
  %s2 = inlined_call_operand.hbm [shape: f32[8,8], index: 2, kind: input, shape index: {}]
  %s3 = inlined_call_operand.vmem [shape: f32[1,8], index: 3, kind: input, shape index: {}]
  %s4 = inlined_call_operand.vmem [shape: f32[8,8], index: 4, kind: input, shape index: {}]
  %s5 = inlined_call_operand.vmem [shape: f32[1,8], index: 5, kind: input, shape index: {}]
  %s6 = inlined_call_operand.hbm [shape: f32[2,8,256], index: 6, kind: output, shape index: {}]
  %s7 = sld [smem:[#allocation0]]
  $region46: #{tpu_custom_call.1} parent=0
    _
  %s9 = ssub.s32 1, %s7
  %s10 = scalar_select 0, %s9, %s7
  $region1: #{tpu_custom_call.1} parent=0
    #allocation2 [shape = 'u8[16384]{0}', space=vmem, size = 0x4000, scoped, tag = 'input window, operand 0, single buffered']
    #allocation3 [shape = 's32[1]{0}', space=sflag, size = 0x4, scoped, tag = 'scoped memory for tpu_custom_call.1']
    #allocation4 [shape = 's32[1]{0}', space=sflag, size = 0x4, scoped, tag = 'scoped memory for tpu_custom_call.1']
    #allocation5 [shape = 'u8[8192]{0}', space=vmem, size = 0x2000, scoped, tag = 'input window, operand 1, single buffered']
    #allocation6 [shape = 's32[1]{0}', space=sflag, size = 0x4, scoped, tag = 'scoped memory for tpu_custom_call.1']
    #allocation7 [shape = 'u8[4096]{0}', space=vmem, size = 0x1000, scoped, tag = 'input window, operand 2, single buffered']
    #allocation8 [shape = 'u8[16384]{0}', space=vmem, size = 0x4000, scoped, tag = 'output window, operand 0, single buffered']
    %11 = vsyncpa [#allocation3], 0
    %12 = vsyncpa [#allocation6], 0
    %13 = vsyncpa [#allocation4], 0
    // Predicated region
    $region2: #{tpu_custom_call.1} parent=1 // pred_check
      _
    $region3: #{tpu_custom_call.1} parent=1 // pred_check_branch
      %15 = sbr.rel (0) target = $region5
    $region4: #{tpu_custom_call.1} parent=1 // pred_region
      %s17 = ssub.s32 512, 512
      %18 = vsyncadd [#allocation3], %s17
      %s19 = sshll.u32 [#allocation2], 4
      %s20 = int_to_ptr.vmem [resolvable:$true] %s19
      %25 = dma.hbm_to_vmem [thread:$0]  %s0, 512, %s20, [#allocation3], 256, 256, 16
    $region5: #{tpu_custom_call.1} parent=1 // pred_fallthru
      _
    // Predicated region
    $region6: #{tpu_custom_call.1} parent=1 // pred_check
      _
    $region7: #{tpu_custom_call.1} parent=1 // pred_check_branch
      %27 = sbr.rel (0) target = $region9
    $region8: #{tpu_custom_call.1} parent=1 // pred_region
      %s29 = ssub.s32 256, 256
      %30 = vsyncadd [#allocation6], %s29
      %s32 = sshll.u32 [#allocation5], 4
      %s33 = int_to_ptr.vmem [resolvable:$true] %s32
      %35 = dma.hbm_to_vmem [thread:$0]  %s1, 256, %s33, [#allocation6]
    $region9: #{tpu_custom_call.1} parent=1 // pred_fallthru
      _
    // Predicated region
    $region10: #{tpu_custom_call.1} parent=1 // pred_check
      _
    $region11: #{tpu_custom_call.1} parent=1 // pred_check_branch
      %37 = sbr.rel (0) target = $region13
    $region12: #{tpu_custom_call.1} parent=1 // pred_region
      %s39 = ssub.s32 128, 128
      %40 = vsyncadd [#allocation6], %s39
      %s42 = sshll.u32 [#allocation7], 4
      %s43 = int_to_ptr.vmem [resolvable:$true] %s42
      %45 = dma.hbm_to_vmem [thread:$0]  %s2, 128, %s43, [#allocation6]
    $region13: #{tpu_custom_call.1} parent=1 // pred_fallthru
      _
    // Predicated region
    $region14: #{tpu_custom_call.1} parent=1 // pred_check
      _
    $region15: #{tpu_custom_call.1} parent=1 // pred_check_branch
      %47 = sbr.rel (0) target = $region17
    $region16: #{tpu_custom_call.1} parent=1 // pred_region
      _
    $region17: #{tpu_custom_call.1} parent=1 // pred_fallthru
      _
    // Predicated region
    $region18: #{tpu_custom_call.1} parent=1 // pred_check
      _
    $region19: #{tpu_custom_call.1} parent=1 // pred_check_branch
      %49 = sbr.rel (0) target = $region21
    $region20: #{tpu_custom_call.1} parent=1 // pred_region
      _
    $region21: #{tpu_custom_call.1} parent=1 // pred_fallthru
      _
    // Predicated region
    $region22: #{tpu_custom_call.1} parent=1 // pred_check
      _
    $region23: #{tpu_custom_call.1} parent=1 // pred_check_branch
      %51 = sbr.rel (0) target = $region25
    $region24: #{tpu_custom_call.1} parent=1 // pred_region
      _
    $region25: #{tpu_custom_call.1} parent=1 // pred_fallthru
      _
    // Predicated region
    $region26: #{tpu_custom_call.1} parent=1 // pred_check
      _
    $region27: #{tpu_custom_call.1} parent=1 // pred_check_branch
      %53 = sbr.rel (0) target = $region29
    $region28: #{tpu_custom_call.1} parent=1 // pred_region
      %54 = dma.done [#allocation3], 512
    $region29: #{tpu_custom_call.1} parent=1 // pred_fallthru
      _
    // Predicated region
    $region30: #{tpu_custom_call.1} parent=1 // pred_check
      _
    $region31: #{tpu_custom_call.1} parent=1 // pred_check_branch
      %56 = sbr.rel (0) target = $region33
    $region32: #{tpu_custom_call.1} parent=1 // pred_region
      %57 = dma.done [#allocation6], 256
    $region33: #{tpu_custom_call.1} parent=1 // pred_fallthru
      _
    // Predicated region
    $region34: #{tpu_custom_call.1} parent=1 // pred_check
      _
    $region35: #{tpu_custom_call.1} parent=1 // pred_check_branch
      %59 = sbr.rel (0) target = $region37
    $region36: #{tpu_custom_call.1} parent=1 // pred_region
      %60 = dma.done [#allocation6], 128
    $region37: #{tpu_custom_call.1} parent=1 // pred_fallthru
      _
    %v61 = vld [vmem:[#allocation2] sm:$0xff]
    %v62 = vld [vmem:[#allocation2 + $0x8] sm:$0xff]
    %v63 = vld [vmem:[#allocation2 + $0x10] sm:$0xff]
    %v64 = vld [vmem:[#allocation2 + $0x18] sm:$0xff]
    %v65 = vadd.f32 %v61, %v62
    %66 = vadd.xlane.f32.xlu0 %v65
    %v67 = vpop.xlane.xlu0 %66
    %v68 = vadd.f32 %v63, %v64
    %69 = vadd.xlane.f32.xlu0 %v68
    %v70 = vpop.xlane.xlu0 %69
    %v71 = vmul.f32 %v67, 0.00390625
    %v72 = vmul.f32 %v70, 0.00390625
    %v73 = vld [vmem:[#allocation7] sm:$0xff]
    %v74 = vmul.f32 %v71, %v73
    %v75 = vmul.f32 %v72, %v73
    %vm76 = vcmask 64512
    %v77 = vsel %vm76, %v74, 0.0
    %v78 = vrot.slane %v77, 4
    %v79 = vadd.f32 %v77, %v78
    %v80 = vrot.slane %v79, 2
    %v81 = vadd.f32 %v79, %v80
    %v82 = vrot.slane %v81, 1
    %v83 = vadd.f32 %v81, %v82
    %v84 = vsel %vm76, %v75, 0.0
    %v85 = vrot.slane %v84, 4
    %v86 = vadd.f32 %v84, %v85
    %v87 = vrot.slane %v86, 2
    %v88 = vadd.f32 %v86, %v87
    %v89 = vrot.slane %v88, 1
    %v90 = vadd.f32 %v88, %v89
    %v91 = vld [vmem:[%s3] sm:$0x1]
    %v93 = vlaneseq
    %v94 = vshrl.u32 %v93, 7
    %v95 = vsub.s32 0, %v94
    %v96 = vrot.slane %v91, %v95
    %v98 = vadd.f32 %v83, %v96
    %v99 = vadd.f32 %v90, %v96
    %v100 = vmax.f32 %v98, 0.0
    %v101 = vmax.f32 %v99, 0.0
    %v102 = vlaneseq
    %v103 = vshrl.u32 %v102, 7
    %v104 = vsub.s32 0, %v103
    %v105 = vrot.slane %v100, %v104
    %107 = vbcast.lane.b32.xlu0 %v105, 256
    %v108 = vpop.permute.xlu0 %107
    %v109 = vlaneseq
    %v110 = vshrl.u32 %v109, 7
    %v111 = vsub.s32 0, %v110
    %v112 = vrot.slane %v101, %v111
    %114 = vbcast.lane.b32.xlu0 %v112, 256
    %v115 = vpop.permute.xlu0 %114
    %v116 = vld [vmem:[%s4] sm:$0xff]
    %v117 = vmul.f32 %v108, %v116
    %v118 = vmul.f32 %v115, %v116
    %v119 = vsel %vm76, %v117, 0.0
    %v120 = vrot.slane %v119, 4
    %v121 = vadd.f32 %v119, %v120
    %v122 = vrot.slane %v121, 2
    %v123 = vadd.f32 %v121, %v122
    %v124 = vrot.slane %v123, 1
    %v125 = vadd.f32 %v123, %v124
    %v126 = vsel %vm76, %v118, 0.0
    %v127 = vrot.slane %v126, 4
    %v128 = vadd.f32 %v126, %v127
    %v129 = vrot.slane %v128, 2
    %v130 = vadd.f32 %v128, %v129
    %v131 = vrot.slane %v130, 1
    %v132 = vadd.f32 %v130, %v131
    %v133 = vld [vmem:[%s5] sm:$0x1]
    %v135 = vlaneseq
    %v136 = vshrl.u32 %v135, 7
    %v137 = vsub.s32 0, %v136
    %v138 = vrot.slane %v133, %v137
    %v140 = vadd.f32 %v125, %v138
    %v141 = vadd.f32 %v132, %v138
    %v142 = vxor.u32 %v140, 2147483648
    %v143 = vxor.u32 %v141, 2147483648
    %v144 = vmul.f32 %v142, 1.442695
    %v145 = vpow.pop %v144
    %v146 = vmul.f32 %v143, 1.442695
    %v147 = vpow.pop %v146
    %v148 = vadd.f32 %v145, 1.0
    %v149 = vadd.f32 %v147, 1.0
    %v150 = vrcp.pop %v148
    %v151 = vmul.f32 1.0, %v150
    %v152 = vrcp.pop %v149
    %v153 = vmul.f32 1.0, %v152
    %v154 = vlaneseq
    %v155 = vshrl.u32 %v154, 7
    %v156 = vsub.s32 0, %v155
    %v157 = vrot.slane %v151, %v156
    %159 = vbcast.lane.b32.xlu0 %v157, 256
    %v160 = vpop.permute.xlu0 %159
    %v161 = vlaneseq
    %v162 = vshrl.u32 %v161, 7
    %v163 = vsub.s32 0, %v162
    %v164 = vrot.slane %v153, %v163
    %166 = vbcast.lane.b32.xlu0 %v164, 256
    %v167 = vpop.permute.xlu0 %166
    %v168 = vld [vmem:[#allocation5] sm:$0xff]
    %v169 = vld [vmem:[#allocation5 + $0x8] sm:$0xff]
    %v170 = vmul.f32 %v160, %v168
    %v171 = vmul.f32 %v160, %v169
    %v172 = vmul.f32 %v167, %v168
    %v173 = vmul.f32 %v167, %v169
    %v174 = vadd.f32 %v61, %v170
    %v175 = vadd.f32 %v62, %v171
    %v176 = vadd.f32 %v63, %v172
    %v177 = vadd.f32 %v64, %v173
    %178 = vst [vmem:[#allocation8] sm:$0xff] %v174
    %179 = vst [vmem:[#allocation8 + $0x8] sm:$0xff] %v175
    %180 = vst [vmem:[#allocation8 + $0x10] sm:$0xff] %v176
    %181 = vst [vmem:[#allocation8 + $0x18] sm:$0xff] %v177
    // Predicated region
    $region38: #{tpu_custom_call.1} parent=1 // pred_check
      _
    $region39: #{tpu_custom_call.1} parent=1 // pred_check_branch
      %183 = sbr.rel (0) target = $region41
    $region40: #{tpu_custom_call.1} parent=1 // pred_region
      %s185 = ssub.s32 512, 512
      %186 = vsyncadd [#allocation4], %s185
      %s187 = sshll.u32 [#allocation8], 4
      %s188 = int_to_ptr.vmem [resolvable:$true] %s187
      %193 = dma.vmem_to_hbm [thread:$0]  %s188, 512, %s6, [#allocation4], 256, 256, 16
    $region41: #{tpu_custom_call.1} parent=1 // pred_fallthru
      _
    // Predicated region
    $region42: #{tpu_custom_call.1} parent=1 // pred_check
      _
    $region43: #{tpu_custom_call.1} parent=1 // pred_check_branch
      %195 = sbr.rel (0) target = $region45
    $region44: #{tpu_custom_call.1} parent=1 // pred_region
      %196 = dma.done [#allocation4], 512
    $region45: #{tpu_custom_call.1} parent=1 // pred_fallthru
      _
    %197 = vsyncpa [#allocation3], 1
    %198 = vsyncpa [#allocation6], 1
    %199 = vsyncpa [#allocation4], 1

</llo_original>
